<compile_context>
chip_gen: v7x
topology: tpu7x:2x2x1
jax: 0.10.0
libtpu: 0.0.40
codegen_flags: <defaults>
</compile_context>

<pallas_src>
import functools

import jax
import jax.numpy as jnp
from jax import lax
from jax.experimental import pallas as pl
from jax.experimental.pallas import tpu as pltpu

ALPHA = 1.0 / (2.0 * 3.14)


def _cdiv(a, b):
    return -(-a // b)


def _round_up(a, b):
    return _cdiv(a, b) * b


def _tpu_config():
    """Return (num_core_splits, tile_vmem_budget, vmem_limit_cap) for this chip."""
    try:
        kind = jax.devices()[0].device_kind.lower()
    except Exception:  # pragma: no cover - defensive
        kind = ""
    if "v7" in kind:
        # 2 TensorCores, only 64 MiB VMEM per TC: split D across cores,
        # keep the scoped-VMEM ask conservative.
        return 2, 40 << 20, 56 << 20
    if ("v5e" in kind or "v5 lite" in kind or "v5litepod" in kind
            or "v6e" in kind or "v6 lite" in kind):
        # Single TensorCore, 128 MiB physical VMEM: no core split, big tiles.
        return 1, 90 << 20, 100 << 20
    # Unknown / other generations: single split, conservative VMEM ask.
    return 1, 40 << 20, 56 << 20


def _mmd_from_grams(xx, yy, zz, alpha, batch):
    """Shared epilogue math: Gram matrices -> scalar MMD^2 (f32)."""
    # diag extraction via an identity mask (no gather); the masked product is
    # computed once per matrix and reused for both row/col reductions.
    row_ids = lax.broadcasted_iota(jnp.int32, (batch, batch), 0)
    col_ids = lax.broadcasted_iota(jnp.int32, (batch, batch), 1)
    eye = (row_ids == col_ids).astype(jnp.float32)
    xx_d = xx * eye
    yy_d = yy * eye
    dx_col = jnp.sum(xx_d, axis=1, keepdims=True)   # (B,1): xx[i,i]
    dx_row = jnp.sum(xx_d, axis=0, keepdims=True)   # (1,B): xx[j,j]
    dy_col = jnp.sum(yy_d, axis=1, keepdims=True)   # (B,1): yy[i,i]
    dy_row = jnp.sum(yy_d, axis=0, keepdims=True)   # (1,B): yy[j,j]

    # K[i,j] = exp(-a*(xx[i,i]+xx[j,j]-2xx[i,j]))   (rx.t()+rx-2xx)
    K = jnp.exp(-alpha * (dx_col + dx_row - 2.0 * xx))
    # L[i,j] = exp(-a*(yy[i,i]+yy[j,j]-2yy[i,j]))   (ry.t()+ry-2yy)
    L = jnp.exp(-alpha * (dy_col + dy_row - 2.0 * yy))
    # P[i,j] = exp(-a*(xx[i,i]+yy[j,j]-2zz[i,j]))   (rx.t()+ry-2zz)
    P = jnp.exp(-alpha * (dx_col + dy_row - 2.0 * zz))

    beta = 1.0 / (batch * (batch - 1))
    gamma = 2.0 / (batch * batch)
    return beta * (jnp.sum(K) + jnp.sum(L)) - gamma * jnp.sum(P)


# ----------------------------------------------------------------------------
# Fused single-kernel path (nc == 1: v5e / v6e / default)
# ----------------------------------------------------------------------------
def _fused_mmd_kernel(x_ref, y_ref, out_ref, xx_acc, yy_acc, zz_acc, *,
                      alpha, batch):
    """Stream one feature chunk, accumulate Grams in VMEM scratch; on the last
    chunk run the epilogue and emit the scalar loss to SMEM."""
    k = pl.program_id(0)

    x = x_ref[...]            # (B, tk) -- native dtype; MXU accumulates in f32
    y = y_ref[...]            # (B, tk)

    # Contract the last (lane) axis of both operands; no explicit transpose in
    # the kernel source (lowering verified separately via pl.lower_as_mlir).
    dims = (((1,), (1,)), ((), ()))
    pxx = lax.dot_general(x, x, dims, preferred_element_type=jnp.float32)
    pyy = lax.dot_general(y, y, dims, preferred_element_type=jnp.float32)
    pzz = lax.dot_general(x, y, dims, preferred_element_type=jnp.float32)

    @pl.when(k == 0)
    def _init():
        xx_acc[...] = pxx
        yy_acc[...] = pyy
        zz_acc[...] = pzz

    @pl.when(k != 0)
    def _accum():
        xx_acc[...] += pxx
        yy_acc[...] += pyy
        zz_acc[...] += pzz

    @pl.when(k == pl.num_programs(0) - 1)
    def _finish():
        loss = _mmd_from_grams(xx_acc[...], yy_acc[...], zz_acc[...],
                               alpha, batch)
        out_ref[0, 0] = loss.astype(out_ref.dtype)


# ----------------------------------------------------------------------------
# Two-stage path (nc == 2: v7x megacore)
# ----------------------------------------------------------------------------
def _gram_kernel(x_ref, y_ref, xx_ref, yy_ref, zz_ref):
    """Accumulate per-core partial Gram matrices over one feature chunk."""
    k = pl.program_id(1)

    x = x_ref[...]
    y = y_ref[...]
    dims = (((1,), (1,)), ((), ()))
    pxx = lax.dot_general(x, x, dims, preferred_element_type=jnp.float32)
    pyy = lax.dot_general(y, y, dims, preferred_element_type=jnp.float32)
    pzz = lax.dot_general(x, y, dims, preferred_element_type=jnp.float32)

    @pl.when(k == 0)
    def _init():
        xx_ref[0] = pxx
        yy_ref[0] = pyy
        zz_ref[0] = pzz

    @pl.when(k != 0)
    def _accum():
        xx_ref[0] += pxx
        yy_ref[0] += pyy
        zz_ref[0] += pzz


def _epilogue_kernel(xx_ref, yy_ref, zz_ref, out_ref, *, alpha, batch, nc):
    """Combine per-core partial Grams and compute the MMD^2 scalar."""
    xx = xx_ref[0]
    yy = yy_ref[0]
    zz = zz_ref[0]
    for c in range(1, nc):            # nc is a static Python int
        xx = xx + xx_ref[c]
        yy = yy + yy_ref[c]
        zz = zz + zz_ref[c]
    loss = _mmd_from_grams(xx, yy, zz, alpha, batch)
    out_ref[0, 0] = loss.astype(out_ref.dtype)


# ----------------------------------------------------------------------------
# Wrapper
# ----------------------------------------------------------------------------
def mmd_loss_jordan(x, y, *, stream_bf16=False):
    """MMD^2 loss; x, y are (B, C, H, W) or (B, D) float arrays.

    stream_bf16=True halves streamed HBM bytes (f32 accumulation kept); off by
    default to preserve parity with the f32 reference.
    """
    if x.ndim == 4:
        x = x.reshape(x.shape[0], -1)   # free for contiguous NCHW
        y = y.reshape(y.shape[0], -1)
    B, D = x.shape
    assert y.shape == (B, D)
    # NOTE: B == 1 divides by zero in beta, exactly like the PyTorch reference.

    if stream_bf16:
        x = x.astype(jnp.bfloat16)
        y = y.astype(jnp.bfloat16)

    nc, tile_budget_cfg, vmem_cap = _tpu_config()
    itemsize = jnp.dtype(x.dtype).itemsize
    rows = _round_up(B, 8)        # sublane-padded tile rows in VMEM
    bcols = _round_up(B, 128)     # lane-padded accumulator columns
    head = 4 << 20                # fixed headroom for compiler scratch

    # Resident (B, B) f32 accumulator footprint:
    #   fused path   -> 3 VMEM scratch buffers (single-buffered)
    #   2-stage path -> 3 output blocks, assume 2 pipeline buffers each
    if nc == 1:
        acc_bytes = 3 * rows * bcols * 4
    else:
        acc_bytes = 3 * 2 * rows * bcols * 4
    # TODO(synk): for very large B the resident (B,B) accumulators alone exceed
    # VMEM; that regime needs a (B-row, B-col)-tiled Gram which is not done here.

    # Largest tk the budget allows: 2 inputs x 2 pipeline buffers x rows x tk,
    # after reserving accumulators + headroom.  No artificial tk cap -- the VMEM
    # budget alone governs (small B => very fat chunks => few grid steps).
    tile_budget = max(tile_budget_cfg - acc_bytes - head,
                      2 * 2 * rows * 128 * itemsize)
    tk = max((tile_budget // (2 * 2 * rows * itemsize)) // 128 * 128, 128)
    tk = min(tk, _round_up(_cdiv(D, nc), 128))   # never bigger than per-core slice
    kc = _cdiv(_cdiv(D, nc), tk)                 # feature chunks per core split
    dp = nc * kc * tk
    if dp != D:
        # Zero-pad the feature dim (zeros contribute nothing to the Grams).
        x = jnp.pad(x, ((0, 0), (0, dp - D)))
        y = jnp.pad(y, ((0, 0), (0, dp - D)))

    tile_bytes = 2 * 2 * rows * tk * itemsize
    vmem_limit = int(min(max(tile_bytes + acc_bytes + head, 32 << 20), vmem_cap))

    if nc == 1:
        # ---- fused single-launch path -------------------------------------
        kern = functools.partial(_fused_mmd_kernel, alpha=ALPHA, batch=B)
        in_spec = pl.BlockSpec((B, tk), lambda k: (0, k))
        out = pl.pallas_call(
            kern,
            out_shape=jax.ShapeDtypeStruct((1, 1), jnp.float32),
            grid_spec=pltpu.PrefetchScalarGridSpec(
                num_scalar_prefetch=0,
                grid=(kc,),
                in_specs=[in_spec, in_spec],
                out_specs=pl.BlockSpec((1, 1), lambda k: (0, 0),
                                       memory_space=pltpu.SMEM),
                scratch_shapes=[pltpu.VMEM((B, B), jnp.float32),
                                pltpu.VMEM((B, B), jnp.float32),
                                pltpu.VMEM((B, B), jnp.float32)],
            ),
            compiler_params=pltpu.CompilerParams(
                dimension_semantics=("arbitrary",),
                vmem_limit_bytes=vmem_limit,
            ),
        )(x, y)
        return out[0, 0]

    # ---- two-stage path (v7x: split D reduction across the 2 TCs) ---------
    gram_shape = jax.ShapeDtypeStruct((nc, B, B), jnp.float32)
    gram_spec = pl.BlockSpec((1, B, B), lambda c, k: (c, 0, 0))
    in_spec = pl.BlockSpec((B, tk), lambda c, k: (0, c * kc + k))

    xx_p, yy_p, zz_p = pl.pallas_call(
        _gram_kernel,
        out_shape=(gram_shape, gram_shape, gram_shape),
        grid_spec=pltpu.PrefetchScalarGridSpec(
            num_scalar_prefetch=0,
            grid=(nc, kc),
            in_specs=[in_spec, in_spec],
            out_specs=[gram_spec, gram_spec, gram_spec],
        ),
        compiler_params=pltpu.CompilerParams(
            dimension_semantics=("parallel", "arbitrary"),
            vmem_limit_bytes=vmem_limit,
        ),
    )(x, y)

    # Epilogue gets its own VMEM accounting (inputs x2 buffers + intermediates).
    epi_in_bytes = 3 * 2 * nc * rows * bcols * 4
    epi_tmp_bytes = 8 * rows * bcols * 4
    epi_limit = int(min(max(epi_in_bytes + epi_tmp_bytes + head, 32 << 20),
                        vmem_cap))
    # TODO(synk): for B >~ 1024 on v7x the epilogue should also be tiled over
    # row blocks of B instead of one full (nc,B,B)x3 block.

    epilogue = functools.partial(_epilogue_kernel, alpha=ALPHA, batch=B, nc=nc)
    full_spec = pl.BlockSpec((nc, B, B), lambda i: (0, 0, 0))
    out = pl.pallas_call(
        epilogue,
        out_shape=jax.ShapeDtypeStruct((1, 1), jnp.float32),
        grid_spec=pltpu.PrefetchScalarGridSpec(
            num_scalar_prefetch=0,
            grid=(1,),
            in_specs=[full_spec, full_spec, full_spec],
            out_specs=pl.BlockSpec((1, 1), lambda i: (0, 0),
                                   memory_space=pltpu.SMEM),
        ),
        compiler_params=pltpu.CompilerParams(
            dimension_semantics=("arbitrary",),
            vmem_limit_bytes=epi_limit,
        ),
    )(xx_p, yy_p, zz_p)
    return out[0, 0]


def _mmd_loss_ref(x, y):
    # pure-JAX reference (mirrors the PyTorch forward exactly)
    if x.ndim == 4:
        x = x.reshape(x.shape[0], -1)
        y = y.reshape(y.shape[0], -1)
    B = x.shape[0]
    xx = x @ x.T
    yy = y @ y.T
    zz = x @ y.T
    rx = jnp.broadcast_to(jnp.diag(xx)[None, :], xx.shape)
    ry = jnp.broadcast_to(jnp.diag(yy)[None, :], yy.shape)
    K = jnp.exp(-ALPHA * (rx.T + rx - 2 * xx))
    L = jnp.exp(-ALPHA * (ry.T + ry - 2 * yy))
    P = jnp.exp(-ALPHA * (rx.T + ry - 2 * zz))
    beta = 1.0 / (B * (B - 1))
    gamma = 2.0 / (B * B)
    return beta * (jnp.sum(K) + jnp.sum(L)) - gamma * jnp.sum(P)


if __name__ == "__main__":
    key = jax.random.PRNGKey(0)
    kx, ky = jax.random.split(key)
    # small NCHW inputs, as the PyTorch forward implies (flattened to B x CHW)
    x = jax.random.normal(kx, (2, 4, 16, 16), dtype=jnp.float32)
    y = jax.random.normal(ky, (2, 4, 16, 16), dtype=jnp.float32) * 0.5 + 0.3

    loss = jax.block_until_ready(mmd_loss_jordan(x, y))
    ref = jax.block_until_ready(_mmd_loss_ref(x, y))

    assert jnp.allclose(loss, ref, rtol=1e-5, atol=1e-5), (loss, ref)
    print("KERNEL_OK")
</pallas_src>

<mosaic_0001>
module attributes {stable_mosaic.version = 11 : i64} {
  func.func @_fused_mmd_kernel(%arg0: i32, %arg1: memref<2x1024xf32, #tpu.memory_space<vmem>>, %arg2: memref<2x1024xf32, #tpu.memory_space<vmem>>, %arg3: memref<1x1xf32, #tpu.memory_space<smem>>, %arg4: memref<2x2xf32, #tpu.memory_space<vmem>>, %arg5: memref<2x2xf32, #tpu.memory_space<vmem>>, %arg6: memref<2x2xf32, #tpu.memory_space<vmem>>) attributes {dimension_semantics = [#tpu.dimension_semantics<arbitrary>], iteration_bounds = array<i64: 1>, scalar_prefetch = 0 : i64, scratch_operands = 3 : i64, tpu.core_type = #tpu.core_type<tc>, window_params = [{transform_indices = @transform_0, window_bounds = array<i64: 2, 1024>}, {transform_indices = @transform_1, window_bounds = array<i64: 2, 1024>}, {transform_indices = @transform_2, window_bounds = array<i64: 1, 1>}]} {
    %c0 = arith.constant 0 : index
    %c0_0 = arith.constant 0 : index
    %0 = vector.load %arg1[%c0, %c0_0] : memref<2x1024xf32, #tpu.memory_space<vmem>>, vector<2x1024xf32>
    %c0_1 = arith.constant 0 : index
    %c0_2 = arith.constant 0 : index
    %1 = vector.load %arg2[%c0_1, %c0_2] : memref<2x1024xf32, #tpu.memory_space<vmem>>, vector<2x1024xf32>
    %cst = arith.constant dense<0.000000e+00> : vector<2x2xf32>
    %2 = tpu.matmul %0, %0, %cst {dimension_numbers = #tpu.dot_dimension_numbers<[1], [1], [0], [0], [0, 0, 1, 0], [], []>} : vector<2x1024xf32>, vector<2x1024xf32>, vector<2x2xf32> -> vector<2x2xf32>
    %cst_3 = arith.constant dense<0.000000e+00> : vector<2x2xf32>
    %3 = tpu.matmul %1, %1, %cst_3 {dimension_numbers = #tpu.dot_dimension_numbers<[1], [1], [0], [0], [0, 0, 1, 0], [], []>} : vector<2x1024xf32>, vector<2x1024xf32>, vector<2x2xf32> -> vector<2x2xf32>
    %cst_4 = arith.constant dense<0.000000e+00> : vector<2x2xf32>
    %4 = tpu.matmul %0, %1, %cst_4 {dimension_numbers = #tpu.dot_dimension_numbers<[1], [1], [0], [0], [0, 0, 1, 0], [], []>} : vector<2x1024xf32>, vector<2x1024xf32>, vector<2x2xf32> -> vector<2x2xf32>
    %c0_i32 = arith.constant 0 : i32
    %5 = arith.cmpi eq, %arg0, %c0_i32 : i32
    %6 = arith.extui %5 : i1 to i32
    %c0_i32_5 = arith.constant 0 : i32
    %7 = arith.cmpi ne, %6, %c0_i32_5 : i32
    scf.if %7 {
      %c0_10 = arith.constant 0 : index
      %c0_11 = arith.constant 0 : index
      %14 = vector.load %arg4[%c0_10, %c0_11] : memref<2x2xf32, #tpu.memory_space<vmem>>, vector<2x2xf32>
      tpu.vector_store %arg4[%c0_10, %c0_11], %2 {strides = array<i32>} : memref<2x2xf32, #tpu.memory_space<vmem>>, vector<2x2xf32>,
      %c0_12 = arith.constant 0 : index
      %c0_13 = arith.constant 0 : index
      %15 = vector.load %arg5[%c0_12, %c0_13] : memref<2x2xf32, #tpu.memory_space<vmem>>, vector<2x2xf32>
      tpu.vector_store %arg5[%c0_12, %c0_13], %3 {strides = array<i32>} : memref<2x2xf32, #tpu.memory_space<vmem>>, vector<2x2xf32>,
      %c0_14 = arith.constant 0 : index
      %c0_15 = arith.constant 0 : index
      %16 = vector.load %arg6[%c0_14, %c0_15] : memref<2x2xf32, #tpu.memory_space<vmem>>, vector<2x2xf32>
      tpu.vector_store %arg6[%c0_14, %c0_15], %4 {strides = array<i32>} : memref<2x2xf32, #tpu.memory_space<vmem>>, vector<2x2xf32>,
    } else {
    }
    %c0_i32_6 = arith.constant 0 : i32
    %8 = arith.cmpi ne, %arg0, %c0_i32_6 : i32
    %9 = arith.extui %8 : i1 to i32
    %c0_i32_7 = arith.constant 0 : i32
    %10 = arith.cmpi ne, %9, %c0_i32_7 : i32
    scf.if %10 {
      %c0_10 = arith.constant 0 : index
      %c0_11 = arith.constant 0 : index
      %14 = vector.load %arg4[%c0_10, %c0_11] : memref<2x2xf32, #tpu.memory_space<vmem>>, vector<2x2xf32>
      %15 = arith.addf %14, %2 : vector<2x2xf32>
      %c0_12 = arith.constant 0 : index
      %c0_13 = arith.constant 0 : index
      %16 = vector.load %arg4[%c0_12, %c0_13] : memref<2x2xf32, #tpu.memory_space<vmem>>, vector<2x2xf32>
      tpu.vector_store %arg4[%c0_12, %c0_13], %15 {strides = array<i32>} : memref<2x2xf32, #tpu.memory_space<vmem>>, vector<2x2xf32>,
      %c0_14 = arith.constant 0 : index
      %c0_15 = arith.constant 0 : index
      %17 = vector.load %arg5[%c0_14, %c0_15] : memref<2x2xf32, #tpu.memory_space<vmem>>, vector<2x2xf32>
      %18 = arith.addf %17, %3 : vector<2x2xf32>
      %c0_16 = arith.constant 0 : index
      %c0_17 = arith.constant 0 : index
      %19 = vector.load %arg5[%c0_16, %c0_17] : memref<2x2xf32, #tpu.memory_space<vmem>>, vector<2x2xf32>
      tpu.vector_store %arg5[%c0_16, %c0_17], %18 {strides = array<i32>} : memref<2x2xf32, #tpu.memory_space<vmem>>, vector<2x2xf32>,
      %c0_18 = arith.constant 0 : index
      %c0_19 = arith.constant 0 : index
      %20 = vector.load %arg6[%c0_18, %c0_19] : memref<2x2xf32, #tpu.memory_space<vmem>>, vector<2x2xf32>
      %21 = arith.addf %20, %4 : vector<2x2xf32>
      %c0_20 = arith.constant 0 : index
      %c0_21 = arith.constant 0 : index
      %22 = vector.load %arg6[%c0_20, %c0_21] : memref<2x2xf32, #tpu.memory_space<vmem>>, vector<2x2xf32>
      tpu.vector_store %arg6[%c0_20, %c0_21], %21 {strides = array<i32>} : memref<2x2xf32, #tpu.memory_space<vmem>>, vector<2x2xf32>,
    } else {
    }
    %c0_i32_8 = arith.constant 0 : i32
    %11 = arith.cmpi eq, %arg0, %c0_i32_8 : i32
    %12 = arith.extui %11 : i1 to i32
    %c0_i32_9 = arith.constant 0 : i32
    %13 = arith.cmpi ne, %12, %c0_i32_9 : i32
    scf.if %13 {
      %c0_10 = arith.constant 0 : index
      %c0_11 = arith.constant 0 : index
      %14 = vector.load %arg4[%c0_10, %c0_11] : memref<2x2xf32, #tpu.memory_space<vmem>>, vector<2x2xf32>
      %c0_12 = arith.constant 0 : index
      %c0_13 = arith.constant 0 : index
      %15 = vector.load %arg5[%c0_12, %c0_13] : memref<2x2xf32, #tpu.memory_space<vmem>>, vector<2x2xf32>
      %c0_14 = arith.constant 0 : index
      %c0_15 = arith.constant 0 : index
      %16 = vector.load %arg6[%c0_14, %c0_15] : memref<2x2xf32, #tpu.memory_space<vmem>>, vector<2x2xf32>
      %17 = tpu.iota {dimensions = array<i32: 0>} : vector<2x2xi32>
      %18 = tpu.iota {dimensions = array<i32: 1>} : vector<2x2xi32>
      %19 = arith.cmpi eq, %17, %18 : vector<2x2xi32>
      %20 = arith.extui %19 : vector<2x2xi1> to vector<2x2xi32>
      %21 = arith.sitofp %20 : vector<2x2xi32> to vector<2x2xf32>
      %22 = arith.mulf %14, %21 : vector<2x2xf32>
      %23 = arith.mulf %15, %21 : vector<2x2xf32>
      %cst_16 = arith.constant dense<0.000000e+00> : vector<2xf32>
      %24 = vector.multi_reduction <add>, %22, %cst_16 [1] : vector<2x2xf32> to vector<2xf32>
      %25 = vector.shape_cast %24 : vector<2xf32> to vector<2x1xf32>
      %cst_17 = arith.constant dense<0.000000e+00> : vector<2xf32>
      %26 = vector.multi_reduction <add>, %22, %cst_17 [0] : vector<2x2xf32> to vector<2xf32>
      %27 = vector.shape_cast %26 : vector<2xf32> to vector<1x2xf32>
      %cst_18 = arith.constant dense<0.000000e+00> : vector<2xf32>
      %28 = vector.multi_reduction <add>, %23, %cst_18 [1] : vector<2x2xf32> to vector<2xf32>
      %29 = vector.shape_cast %28 : vector<2xf32> to vector<2x1xf32>
      %cst_19 = arith.constant dense<0.000000e+00> : vector<2xf32>
      %30 = vector.multi_reduction <add>, %23, %cst_19 [0] : vector<2x2xf32> to vector<2xf32>
      %31 = vector.shape_cast %30 : vector<2xf32> to vector<1x2xf32>
      %32 = vector.broadcast %25 : vector<2x1xf32> to vector<2x2xf32>
      %33 = vector.broadcast %27 : vector<1x2xf32> to vector<2x2xf32>
      %34 = arith.addf %32, %33 : vector<2x2xf32>
      %cst_20 = arith.constant 2.000000e+00 : f32
      %35 = vector.broadcast %cst_20 : f32 to vector<2x2xf32>
      %36 = arith.mulf %35, %14 : vector<2x2xf32>
      %37 = arith.subf %34, %36 : vector<2x2xf32>
      %cst_21 = arith.constant -0.159235671 : f32
      %38 = vector.broadcast %cst_21 : f32 to vector<2x2xf32>
      %39 = arith.mulf %38, %37 : vector<2x2xf32>
      %40 = math.exp %39 : vector<2x2xf32>
      %41 = vector.broadcast %29 : vector<2x1xf32> to vector<2x2xf32>
      %42 = vector.broadcast %31 : vector<1x2xf32> to vector<2x2xf32>
      %43 = arith.addf %41, %42 : vector<2x2xf32>
      %cst_22 = arith.constant 2.000000e+00 : f32
      %44 = vector.broadcast %cst_22 : f32 to vector<2x2xf32>
      %45 = arith.mulf %44, %15 : vector<2x2xf32>
      %46 = arith.subf %43, %45 : vector<2x2xf32>
      %cst_23 = arith.constant -0.159235671 : f32
      %47 = vector.broadcast %cst_23 : f32 to vector<2x2xf32>
      %48 = arith.mulf %47, %46 : vector<2x2xf32>
      %49 = math.exp %48 : vector<2x2xf32>
      %50 = vector.broadcast %25 : vector<2x1xf32> to vector<2x2xf32>
      %51 = vector.broadcast %31 : vector<1x2xf32> to vector<2x2xf32>
      %52 = arith.addf %50, %51 : vector<2x2xf32>
      %cst_24 = arith.constant 2.000000e+00 : f32
      %53 = vector.broadcast %cst_24 : f32 to vector<2x2xf32>
      %54 = arith.mulf %53, %16 : vector<2x2xf32>
      %55 = arith.subf %52, %54 : vector<2x2xf32>
      %cst_25 = arith.constant -0.159235671 : f32
      %56 = vector.broadcast %cst_25 : f32 to vector<2x2xf32>
      %57 = arith.mulf %56, %55 : vector<2x2xf32>
      %58 = math.exp %57 : vector<2x2xf32>
      %59 = vector.shape_cast %40 : vector<2x2xf32> to vector<1x2x2xf32>
      %cst_26 = arith.constant dense<0.000000e+00> : vector<1xf32>
      %60 = vector.multi_reduction <add>, %59, %cst_26 [1, 2] : vector<1x2x2xf32> to vector<1xf32>
      %61 = vector.shape_cast %60 : vector<1xf32> to vector<1x1x1xf32>
      %62 = vector.extract %61[0, 0, 0] : f32 from vector<1x1x1xf32>
      %63 = vector.shape_cast %49 : vector<2x2xf32> to vector<1x2x2xf32>
      %cst_27 = arith.constant dense<0.000000e+00> : vector<1xf32>
      %64 = vector.multi_reduction <add>, %63, %cst_27 [1, 2] : vector<1x2x2xf32> to vector<1xf32>
      %65 = vector.shape_cast %64 : vector<1xf32> to vector<1x1x1xf32>
      %66 = vector.extract %65[0, 0, 0] : f32 from vector<1x1x1xf32>
      %67 = arith.addf %62, %66 : f32
      %cst_28 = arith.constant 5.000000e-01 : f32
      %68 = arith.mulf %cst_28, %67 : f32
      %69 = vector.shape_cast %58 : vector<2x2xf32> to vector<1x2x2xf32>
      %cst_29 = arith.constant dense<0.000000e+00> : vector<1xf32>
      %70 = vector.multi_reduction <add>, %69, %cst_29 [1, 2] : vector<1x2x2xf32> to vector<1xf32>
      %71 = vector.shape_cast %70 : vector<1xf32> to vector<1x1x1xf32>
      %72 = vector.extract %71[0, 0, 0] : f32 from vector<1x1x1xf32>
      %cst_30 = arith.constant 5.000000e-01 : f32
      %73 = arith.mulf %cst_30, %72 : f32
      %74 = arith.subf %68, %73 : f32
      %c0_31 = arith.constant 0 : index
      %c0_32 = arith.constant 0 : index
      %75 = memref.load %arg3[%c0_31, %c0_32] : memref<1x1xf32, #tpu.memory_space<smem>>
      memref.store %74, %arg3[%c0_31, %c0_32] : memref<1x1xf32, #tpu.memory_space<smem>>
    } else {
    }
    return
  }
  func.func @transform_0(%arg0: i32) -> (i32, i32) {
    %c0_i32 = arith.constant 0 : i32
    %c0_i32_0 = arith.constant 0 : i32
    return %c0_i32, %arg0 : i32, i32
  }
  func.func @transform_1(%arg0: i32) -> (i32, i32) {
    %c0_i32 = arith.constant 0 : i32
    %c0_i32_0 = arith.constant 0 : i32
    return %c0_i32, %arg0 : i32, i32
  }
  func.func @transform_2(%arg0: i32) -> (i32, i32) {
    %c0_i32 = arith.constant 0 : i32
    %c0_i32_0 = arith.constant 0 : i32
    %c0_i32_1 = arith.constant 0 : i32
    return %c0_i32, %c0_i32_0 : i32, i32
  }
}

</mosaic_0001>

<llo_original>
// kernel: tpu_custom_call.1
$region0: #{tpu_custom_call.1}
  #allocation0 [shape = 'u32[]', space=smem, size = 0x4, offset = 0x4, fixed_abs, tag = 'smem constant byte address 0x4 - core index']
  #allocation1 [shape = 'u32[144,128]{1,0:T(1,128)}', space=vmem, size = 0x12000, scoped, tag = 'internal scratch']
  #allocation2 [shape = 'f32[2,2]{1,0:T(2,128)}', space=vmem, size = 0x400, scoped, tag = 'scratch operand']
  #allocation3 [shape = 'f32[2,2]{1,0:T(2,128)}', space=vmem, size = 0x400, scoped, tag = 'scratch operand']
  #allocation4 [shape = 'f32[2,2]{1,0:T(2,128)}', space=vmem, size = 0x400, scoped, tag = 'scratch operand']
  %s0 = inlined_call_operand.hbm [shape: f32[2,1024], index: 0, kind: input, shape index: {}]
  %s1 = inlined_call_operand.hbm [shape: f32[2,1024], index: 1, kind: input, shape index: {}]
  %s2 = inlined_call_operand.hbm [shape: f32[1,1], index: 2, kind: output, shape index: {}]
  %s3 = sld [smem:[#allocation0]]
  $region38: #{tpu_custom_call.1} parent=0
    _
  %s5 = ssub.s32 1, %s3
  %s6 = scalar_select 0, %s5, %s3
  $region1: #{tpu_custom_call.1} parent=0
    #allocation5 [shape = 'u8[8192]{0}', space=vmem, size = 0x2000, scoped, tag = 'input window, operand 0, single buffered']
    #allocation6 [shape = 's32[1]{0}', space=sflag, size = 0x4, scoped, tag = 'scoped memory for tpu_custom_call.1']
    #allocation7 [shape = 's32[1]{0}', space=sflag, size = 0x4, scoped, tag = 'scoped memory for tpu_custom_call.1']
    #allocation8 [shape = 'u8[8192]{0}', space=vmem, size = 0x2000, scoped, tag = 'input window, operand 1, single buffered']
    #allocation9 [shape = 's32[1]{0}', space=sflag, size = 0x4, scoped, tag = 'scoped memory for tpu_custom_call.1']
    #allocation10 [shape = 'u8[512]{0}', space=smem, size = 0x200, scoped, tag = 'output window, operand 0, single buffered']
    %7 = vsyncpa [#allocation6], 0
    %8 = vsyncpa [#allocation9], 0
    %9 = vsyncpa [#allocation7], 0
    // Predicated region
    $region2: #{tpu_custom_call.1} parent=1 // pred_check
      _
    $region3: #{tpu_custom_call.1} parent=1 // pred_check_branch
      %11 = sbr.rel (0) target = $region5
    $region4: #{tpu_custom_call.1} parent=1 // pred_region
      %s13 = ssub.s32 256, 256
      %14 = vsyncadd [#allocation6], %s13
      %s16 = sshll.u32 [#allocation5], 4
      %s17 = int_to_ptr.vmem [resolvable:$true] %s16
      %19 = dma.hbm_to_vmem [thread:$0]  %s0, 256, %s17, [#allocation6]
    $region5: #{tpu_custom_call.1} parent=1 // pred_fallthru
      _
    // Predicated region
    $region6: #{tpu_custom_call.1} parent=1 // pred_check
      _
    $region7: #{tpu_custom_call.1} parent=1 // pred_check_branch
      %21 = sbr.rel (0) target = $region9
    $region8: #{tpu_custom_call.1} parent=1 // pred_region
      %s23 = ssub.s32 256, 256
      %24 = vsyncadd [#allocation9], %s23
      %s26 = sshll.u32 [#allocation8], 4
      %s27 = int_to_ptr.vmem [resolvable:$true] %s26
      %29 = dma.hbm_to_vmem [thread:$0]  %s1, 256, %s27, [#allocation9]
    $region9: #{tpu_custom_call.1} parent=1 // pred_fallthru
      _
    // Predicated region
    $region10: #{tpu_custom_call.1} parent=1 // pred_check
      _
    $region11: #{tpu_custom_call.1} parent=1 // pred_check_branch
      %31 = sbr.rel (0) target = $region13
    $region12: #{tpu_custom_call.1} parent=1 // pred_region
      %32 = dma.done [#allocation6], 256
    $region13: #{tpu_custom_call.1} parent=1 // pred_fallthru
      _
    // Predicated region
    $region14: #{tpu_custom_call.1} parent=1 // pred_check
      _
    $region15: #{tpu_custom_call.1} parent=1 // pred_check_branch
      %34 = sbr.rel (0) target = $region17
    $region16: #{tpu_custom_call.1} parent=1 // pred_region
      %35 = dma.done [#allocation9], 256
    $region17: #{tpu_custom_call.1} parent=1 // pred_fallthru
      _
    %v36 = vld [vmem:[#allocation5] sm:$0xff]
    %v37 = vld [vmem:[#allocation5 + $0x8] sm:$0xff]
    %v38 = vld [vmem:[#allocation8] sm:$0xff]
    %v39 = vld [vmem:[#allocation8 + $0x8] sm:$0xff]
    %v42 = vcombine.high %v36, %v36
    %v44 = vunpack.c.l.s4 1983009808
    %v45 = vunpack.c.0.s8 %v44
    %v46 = vlaneseq
    %v47 = vshrl.u32 %v46, 7
    %v48 = vsub.s32 %v45, %v47
    %v49 = vrot.slane %v36, %v48
    %v51 = vunpack.c.l.s4 1983009808
    %v52 = vunpack.c.0.s8 %v51
    %v53 = vlaneseq
    %v54 = vshrl.u32 %v53, 7
    %v55 = vsub.s32 %v52, %v54
    %v56 = vrot.slane %v42, %v55
    %v57 = vcombine.high %v49, %v49
    %v58 = vcombine.high %v56, %v56
    %v59 = vcombine.high %v37, %v37
    %v61 = vunpack.c.l.s4 1983009808
    %v62 = vunpack.c.0.s8 %v61
    %v63 = vlaneseq
    %v64 = vshrl.u32 %v63, 7
    %v65 = vsub.s32 %v62, %v64
    %v66 = vrot.slane %v37, %v65
    %v68 = vunpack.c.l.s4 1983009808
    %v69 = vunpack.c.0.s8 %v68
    %v70 = vlaneseq
    %v71 = vshrl.u32 %v70, 7
    %v72 = vsub.s32 %v69, %v71
    %v73 = vrot.slane %v59, %v72
    %v74 = vcombine.high %v66, %v66
    %v75 = vcombine.high %v73, %v73
    %84 = vmatprep.subr.mxu0 %v57
    %85 = vmatpush1.xpose.msra.mxu0 %v49
    %86 = vmatprep.subr.mxu0 0.0
    %87 = vmatpush1.xpose.msra.mxu0 0.0
    %88 = vmatprep.subr.mxu0 0.0
    %89 = vmatpush1.xpose.msra.mxu0 0.0
    %90 = vmatprep.subr.mxu0 0.0
    %91 = vmatpush1.xpose.msra.mxu0 0.0
    %92 = vmatprep.subr.mxu0 0.0
    %93 = vmatpush1.xpose.msra.mxu0 0.0
    %94 = vmatprep.subr.mxu0 0.0
    %95 = vmatpush1.xpose.msra.mxu0 0.0
    %96 = vmatprep.subr.mxu0 0.0
    %97 = vmatpush1.xpose.msra.mxu0 0.0
    %98 = vmatprep.subr.mxu0 0.0
    %99 = vmatpush1.xpose.msra.mxu0 0.0
    %100 = vmatprep.subr.mxu0 0.0
    %101 = vmatpush1.xpose.msra.mxu0 0.0
    %102 = vmatprep.subr.mxu0 0.0
    %103 = vmatpush1.xpose.msra.mxu0 0.0
    %104 = vmatprep.subr.mxu0 0.0
    %105 = vmatpush1.xpose.msra.mxu0 0.0
    %106 = vmatprep.subr.mxu0 0.0
    %107 = vmatpush1.xpose.msra.mxu0 0.0
    %108 = vmatprep.subr.mxu0 0.0
    %109 = vmatpush1.xpose.msra.mxu0 0.0
    %110 = vmatprep.subr.mxu0 0.0
    %111 = vmatpush1.xpose.msra.mxu0 0.0
    %112 = vmatprep.subr.mxu0 0.0
    %113 = vmatpush1.xpose.msra.mxu0 0.0
    %114 = vmatprep.subr.mxu0 0.0
    %115 = vmatpush1.xpose.msra.mxu0 0.0
    %116 = vmatprep.subr.mxu0 0.0
    %117 = vmatpush1.xpose.msra.mxu0 0.0
    %118 = vmatprep.subr.mxu0 0.0
    %119 = vmatpush1.xpose.msra.mxu0 0.0
    %120 = vmatprep.subr.mxu0 0.0
    %121 = vmatpush1.xpose.msra.mxu0 0.0
    %122 = vmatprep.subr.mxu0 0.0
    %123 = vmatpush1.xpose.msra.mxu0 0.0
    %124 = vmatprep.subr.mxu0 0.0
    %125 = vmatpush1.xpose.msra.mxu0 0.0
    %126 = vmatprep.subr.mxu0 0.0
    %127 = vmatpush1.xpose.msra.mxu0 0.0
    %128 = vmatprep.subr.mxu0 0.0
    %129 = vmatpush1.xpose.msra.mxu0 0.0
    %130 = vmatprep.subr.mxu0 0.0
    %131 = vmatpush1.xpose.msra.mxu0 0.0
    %132 = vmatprep.subr.mxu0 0.0
    %133 = vmatpush1.xpose.msra.mxu0 0.0
    %134 = vmatprep.subr.mxu0 0.0
    %135 = vmatpush1.xpose.msra.mxu0 0.0
    %136 = vmatprep.subr.mxu0 0.0
    %137 = vmatpush1.xpose.msra.mxu0 0.0
    %138 = vmatprep.subr.mxu0 0.0
    %139 = vmatpush1.xpose.msra.mxu0 0.0
    %140 = vmatprep.subr.mxu0 0.0
    %141 = vmatpush1.xpose.msra.mxu0 0.0
    %142 = vmatprep.subr.mxu0 0.0
    %143 = vmatpush1.xpose.msra.mxu0 0.0
    %144 = vmatprep.subr.mxu0 0.0
    %145 = vmatpush1.xpose.msra.mxu0 0.0
    %146 = vmatprep.subr.mxu0 0.0
    %147 = vmatpush1.xpose.msra.mxu0 0.0
    %148 = vmatprep.mubr.f32.mxu0 %v57
    %149 = vmatmul.mubr.f32.gmra.mrb[0].mxu0 %v49
    %v150 = vpop.f32.mrb[0].mxu0
    %v151 = vadd.f32 0.0, %v150
    %v152 = vpop.f32.mrb[0].mxu0
    %153 = vdwg.mxu0
    %154 = vmatprep.subr.mxu0 %v58
    %155 = vmatpush1.xpose.msra.mxu0 %v56
    %156 = vmatprep.subr.mxu0 0.0
    %157 = vmatpush1.xpose.msra.mxu0 0.0
    %158 = vmatprep.subr.mxu0 0.0
    %159 = vmatpush1.xpose.msra.mxu0 0.0
    %160 = vmatprep.subr.mxu0 0.0
    %161 = vmatpush1.xpose.msra.mxu0 0.0
    %162 = vmatprep.subr.mxu0 0.0
    %163 = vmatpush1.xpose.msra.mxu0 0.0
    %164 = vmatprep.subr.mxu0 0.0
    %165 = vmatpush1.xpose.msra.mxu0 0.0
    %166 = vmatprep.subr.mxu0 0.0
    %167 = vmatpush1.xpose.msra.mxu0 0.0
    %168 = vmatprep.subr.mxu0 0.0
    %169 = vmatpush1.xpose.msra.mxu0 0.0
    %170 = vmatprep.subr.mxu0 0.0
    %171 = vmatpush1.xpose.msra.mxu0 0.0
    %172 = vmatprep.subr.mxu0 0.0
    %173 = vmatpush1.xpose.msra.mxu0 0.0
    %174 = vmatprep.subr.mxu0 0.0
    %175 = vmatpush1.xpose.msra.mxu0 0.0
    %176 = vmatprep.subr.mxu0 0.0
    %177 = vmatpush1.xpose.msra.mxu0 0.0
    %178 = vmatprep.subr.mxu0 0.0
    %179 = vmatpush1.xpose.msra.mxu0 0.0
    %180 = vmatprep.subr.mxu0 0.0
    %181 = vmatpush1.xpose.msra.mxu0 0.0
    %182 = vmatprep.subr.mxu0 0.0
    %183 = vmatpush1.xpose.msra.mxu0 0.0
    %184 = vmatprep.subr.mxu0 0.0
    %185 = vmatpush1.xpose.msra.mxu0 0.0
    %186 = vmatprep.subr.mxu0 0.0
    %187 = vmatpush1.xpose.msra.mxu0 0.0
    %188 = vmatprep.subr.mxu0 0.0
    %189 = vmatpush1.xpose.msra.mxu0 0.0
    %190 = vmatprep.subr.mxu0 0.0
    %191 = vmatpush1.xpose.msra.mxu0 0.0
    %192 = vmatprep.subr.mxu0 0.0
    %193 = vmatpush1.xpose.msra.mxu0 0.0
    %194 = vmatprep.subr.mxu0 0.0
    %195 = vmatpush1.xpose.msra.mxu0 0.0
    %196 = vmatprep.subr.mxu0 0.0
    %197 = vmatpush1.xpose.msra.mxu0 0.0
    %198 = vmatprep.subr.mxu0 0.0
    %199 = vmatpush1.xpose.msra.mxu0 0.0
    %200 = vmatprep.subr.mxu0 0.0
    %201 = vmatpush1.xpose.msra.mxu0 0.0
    %202 = vmatprep.subr.mxu0 0.0
    %203 = vmatpush1.xpose.msra.mxu0 0.0
    %204 = vmatprep.subr.mxu0 0.0
    %205 = vmatpush1.xpose.msra.mxu0 0.0
    %206 = vmatprep.subr.mxu0 0.0
    %207 = vmatpush1.xpose.msra.mxu0 0.0
    %208 = vmatprep.subr.mxu0 0.0
    %209 = vmatpush1.xpose.msra.mxu0 0.0
    %210 = vmatprep.subr.mxu0 0.0
    %211 = vmatpush1.xpose.msra.mxu0 0.0
    %212 = vmatprep.subr.mxu0 0.0
    %213 = vmatpush1.xpose.msra.mxu0 0.0
    %214 = vmatprep.subr.mxu0 0.0
    %215 = vmatpush1.xpose.msra.mxu0 0.0
    %216 = vmatprep.subr.mxu0 0.0
    %217 = vmatpush1.xpose.msra.mxu0 0.0
    %218 = vmatprep.mubr.f32.mxu0 %v58
    %219 = vmatmul.mubr.f32.gmra.mrb[0].mxu0 %v56
    %v220 = vpop.f32.mrb[0].mxu0
    %v221 = vadd.f32 %v151, %v220
    %v222 = vpop.f32.mrb[0].mxu0
    %223 = vdwg.mxu0
    %224 = vmatprep.subr.mxu0 %v74
    %225 = vmatpush1.xpose.msra.mxu0 %v66
    %226 = vmatprep.subr.mxu0 0.0
    %227 = vmatpush1.xpose.msra.mxu0 0.0
    %228 = vmatprep.subr.mxu0 0.0
    %229 = vmatpush1.xpose.msra.mxu0 0.0
    %230 = vmatprep.subr.mxu0 0.0
    %231 = vmatpush1.xpose.msra.mxu0 0.0
    %232 = vmatprep.subr.mxu0 0.0
    %233 = vmatpush1.xpose.msra.mxu0 0.0
    %234 = vmatprep.subr.mxu0 0.0
    %235 = vmatpush1.xpose.msra.mxu0 0.0
    %236 = vmatprep.subr.mxu0 0.0
    %237 = vmatpush1.xpose.msra.mxu0 0.0
    %238 = vmatprep.subr.mxu0 0.0
    %239 = vmatpush1.xpose.msra.mxu0 0.0
    %240 = vmatprep.subr.mxu0 0.0
    %241 = vmatpush1.xpose.msra.mxu0 0.0
    %242 = vmatprep.subr.mxu0 0.0
    %243 = vmatpush1.xpose.msra.mxu0 0.0
    %244 = vmatprep.subr.mxu0 0.0
    %245 = vmatpush1.xpose.msra.mxu0 0.0
    %246 = vmatprep.subr.mxu0 0.0
    %247 = vmatpush1.xpose.msra.mxu0 0.0
    %248 = vmatprep.subr.mxu0 0.0
    %249 = vmatpush1.xpose.msra.mxu0 0.0
    %250 = vmatprep.subr.mxu0 0.0
    %251 = vmatpush1.xpose.msra.mxu0 0.0
    %252 = vmatprep.subr.mxu0 0.0
    %253 = vmatpush1.xpose.msra.mxu0 0.0
    %254 = vmatprep.subr.mxu0 0.0
    %255 = vmatpush1.xpose.msra.mxu0 0.0
    %256 = vmatprep.subr.mxu0 0.0
    %257 = vmatpush1.xpose.msra.mxu0 0.0
    %258 = vmatprep.subr.mxu0 0.0
    %259 = vmatpush1.xpose.msra.mxu0 0.0
    %260 = vmatprep.subr.mxu0 0.0
    %261 = vmatpush1.xpose.msra.mxu0 0.0
    %262 = vmatprep.subr.mxu0 0.0
    %263 = vmatpush1.xpose.msra.mxu0 0.0
    %264 = vmatprep.subr.mxu0 0.0
    %265 = vmatpush1.xpose.msra.mxu0 0.0
    %266 = vmatprep.subr.mxu0 0.0
    %267 = vmatpush1.xpose.msra.mxu0 0.0
    %268 = vmatprep.subr.mxu0 0.0
    %269 = vmatpush1.xpose.msra.mxu0 0.0
    %270 = vmatprep.subr.mxu0 0.0
    %271 = vmatpush1.xpose.msra.mxu0 0.0
    %272 = vmatprep.subr.mxu0 0.0
    %273 = vmatpush1.xpose.msra.mxu0 0.0
    %274 = vmatprep.subr.mxu0 0.0
    %275 = vmatpush1.xpose.msra.mxu0 0.0
    %276 = vmatprep.subr.mxu0 0.0
    %277 = vmatpush1.xpose.msra.mxu0 0.0
    %278 = vmatprep.subr.mxu0 0.0
    %279 = vmatpush1.xpose.msra.mxu0 0.0
    %280 = vmatprep.subr.mxu0 0.0
    %281 = vmatpush1.xpose.msra.mxu0 0.0
    %282 = vmatprep.subr.mxu0 0.0
    %283 = vmatpush1.xpose.msra.mxu0 0.0
    %284 = vmatprep.subr.mxu0 0.0
    %285 = vmatpush1.xpose.msra.mxu0 0.0
    %286 = vmatprep.subr.mxu0 0.0
    %287 = vmatpush1.xpose.msra.mxu0 0.0
    %288 = vmatprep.mubr.f32.mxu0 %v74
    %289 = vmatmul.mubr.f32.gmra.mrb[0].mxu0 %v66
    %v290 = vpop.f32.mrb[0].mxu0
    %v291 = vadd.f32 %v221, %v290
    %v292 = vpop.f32.mrb[0].mxu0
    %293 = vdwg.mxu0
    %294 = vmatprep.subr.mxu0 %v75
    %295 = vmatpush1.xpose.msra.mxu0 %v73
    %296 = vmatprep.subr.mxu0 0.0
    %297 = vmatpush1.xpose.msra.mxu0 0.0
    %298 = vmatprep.subr.mxu0 0.0
    %299 = vmatpush1.xpose.msra.mxu0 0.0
    %300 = vmatprep.subr.mxu0 0.0
    %301 = vmatpush1.xpose.msra.mxu0 0.0
    %302 = vmatprep.subr.mxu0 0.0
    %303 = vmatpush1.xpose.msra.mxu0 0.0
    %304 = vmatprep.subr.mxu0 0.0
    %305 = vmatpush1.xpose.msra.mxu0 0.0
    %306 = vmatprep.subr.mxu0 0.0
    %307 = vmatpush1.xpose.msra.mxu0 0.0
    %308 = vmatprep.subr.mxu0 0.0
    %309 = vmatpush1.xpose.msra.mxu0 0.0
    %310 = vmatprep.subr.mxu0 0.0
    %311 = vmatpush1.xpose.msra.mxu0 0.0
    %312 = vmatprep.subr.mxu0 0.0
    %313 = vmatpush1.xpose.msra.mxu0 0.0
    %314 = vmatprep.subr.mxu0 0.0
    %315 = vmatpush1.xpose.msra.mxu0 0.0
    %316 = vmatprep.subr.mxu0 0.0
    %317 = vmatpush1.xpose.msra.mxu0 0.0
    %318 = vmatprep.subr.mxu0 0.0
    %319 = vmatpush1.xpose.msra.mxu0 0.0
    %320 = vmatprep.subr.mxu0 0.0
    %321 = vmatpush1.xpose.msra.mxu0 0.0
    %322 = vmatprep.subr.mxu0 0.0
    %323 = vmatpush1.xpose.msra.mxu0 0.0
    %324 = vmatprep.subr.mxu0 0.0
    %325 = vmatpush1.xpose.msra.mxu0 0.0
    %326 = vmatprep.subr.mxu0 0.0
    %327 = vmatpush1.xpose.msra.mxu0 0.0
    %328 = vmatprep.subr.mxu0 0.0
    %329 = vmatpush1.xpose.msra.mxu0 0.0
    %330 = vmatprep.subr.mxu0 0.0
    %331 = vmatpush1.xpose.msra.mxu0 0.0
    %332 = vmatprep.subr.mxu0 0.0
    %333 = vmatpush1.xpose.msra.mxu0 0.0
    %334 = vmatprep.subr.mxu0 0.0
    %335 = vmatpush1.xpose.msra.mxu0 0.0
    %336 = vmatprep.subr.mxu0 0.0
    %337 = vmatpush1.xpose.msra.mxu0 0.0
    %338 = vmatprep.subr.mxu0 0.0
    %339 = vmatpush1.xpose.msra.mxu0 0.0
    %340 = vmatprep.subr.mxu0 0.0
    %341 = vmatpush1.xpose.msra.mxu0 0.0
    %342 = vmatprep.subr.mxu0 0.0
    %343 = vmatpush1.xpose.msra.mxu0 0.0
    %344 = vmatprep.subr.mxu0 0.0
    %345 = vmatpush1.xpose.msra.mxu0 0.0
    %346 = vmatprep.subr.mxu0 0.0
    %347 = vmatpush1.xpose.msra.mxu0 0.0
    %348 = vmatprep.subr.mxu0 0.0
    %349 = vmatpush1.xpose.msra.mxu0 0.0
    %350 = vmatprep.subr.mxu0 0.0
    %351 = vmatpush1.xpose.msra.mxu0 0.0
    %352 = vmatprep.subr.mxu0 0.0
    %353 = vmatpush1.xpose.msra.mxu0 0.0
    %354 = vmatprep.subr.mxu0 0.0
    %355 = vmatpush1.xpose.msra.mxu0 0.0
    %356 = vmatprep.subr.mxu0 0.0
    %357 = vmatpush1.xpose.msra.mxu0 0.0
    %358 = vmatprep.mubr.f32.mxu0 %v75
    %359 = vmatmul.mubr.f32.gmra.mrb[0].mxu0 %v73
    %v360 = vpop.f32.mrb[0].mxu0
    %v361 = vadd.f32 %v291, %v360
    %v362 = vpop.f32.mrb[0].mxu0
    %363 = vdwg.mxu0
    %v366 = vcombine.high %v38, %v38
    %v368 = vunpack.c.l.s4 1983009808
    %v369 = vunpack.c.0.s8 %v368
    %v370 = vlaneseq
    %v371 = vshrl.u32 %v370, 7
    %v372 = vsub.s32 %v369, %v371
    %v373 = vrot.slane %v38, %v372
    %v375 = vunpack.c.l.s4 1983009808
    %v376 = vunpack.c.0.s8 %v375
    %v377 = vlaneseq
    %v378 = vshrl.u32 %v377, 7
    %v379 = vsub.s32 %v376, %v378
    %v380 = vrot.slane %v366, %v379
    %v381 = vcombine.high %v373, %v373
    %v382 = vcombine.high %v380, %v380
    %v383 = vcombine.high %v39, %v39
    %v385 = vunpack.c.l.s4 1983009808
    %v386 = vunpack.c.0.s8 %v385
    %v387 = vlaneseq
    %v388 = vshrl.u32 %v387, 7
    %v389 = vsub.s32 %v386, %v388
    %v390 = vrot.slane %v39, %v389
    %v392 = vunpack.c.l.s4 1983009808
    %v393 = vunpack.c.0.s8 %v392
    %v394 = vlaneseq
    %v395 = vshrl.u32 %v394, 7
    %v396 = vsub.s32 %v393, %v395
    %v397 = vrot.slane %v383, %v396
    %v398 = vcombine.high %v390, %v390
    %v399 = vcombine.high %v397, %v397
    %408 = vmatprep.subr.mxu0 %v381
    %409 = vmatpush1.xpose.msra.mxu0 %v373
    %410 = vmatprep.subr.mxu0 0.0
    %411 = vmatpush1.xpose.msra.mxu0 0.0
    %412 = vmatprep.subr.mxu0 0.0
    %413 = vmatpush1.xpose.msra.mxu0 0.0
    %414 = vmatprep.subr.mxu0 0.0
    %415 = vmatpush1.xpose.msra.mxu0 0.0
    %416 = vmatprep.subr.mxu0 0.0
    %417 = vmatpush1.xpose.msra.mxu0 0.0
    %418 = vmatprep.subr.mxu0 0.0
    %419 = vmatpush1.xpose.msra.mxu0 0.0
    %420 = vmatprep.subr.mxu0 0.0
    %421 = vmatpush1.xpose.msra.mxu0 0.0
    %422 = vmatprep.subr.mxu0 0.0
    %423 = vmatpush1.xpose.msra.mxu0 0.0
    %424 = vmatprep.subr.mxu0 0.0
    %425 = vmatpush1.xpose.msra.mxu0 0.0
    %426 = vmatprep.subr.mxu0 0.0
    %427 = vmatpush1.xpose.msra.mxu0 0.0
    %428 = vmatprep.subr.mxu0 0.0
    %429 = vmatpush1.xpose.msra.mxu0 0.0
    %430 = vmatprep.subr.mxu0 0.0
    %431 = vmatpush1.xpose.msra.mxu0 0.0
    %432 = vmatprep.subr.mxu0 0.0
    %433 = vmatpush1.xpose.msra.mxu0 0.0
    %434 = vmatprep.subr.mxu0 0.0
    %435 = vmatpush1.xpose.msra.mxu0 0.0
    %436 = vmatprep.subr.mxu0 0.0
    %437 = vmatpush1.xpose.msra.mxu0 0.0
    %438 = vmatprep.subr.mxu0 0.0
    %439 = vmatpush1.xpose.msra.mxu0 0.0
    %440 = vmatprep.subr.mxu0 0.0
    %441 = vmatpush1.xpose.msra.mxu0 0.0
    %442 = vmatprep.subr.mxu0 0.0
    %443 = vmatpush1.xpose.msra.mxu0 0.0
    %444 = vmatprep.subr.mxu0 0.0
    %445 = vmatpush1.xpose.msra.mxu0 0.0
    %446 = vmatprep.subr.mxu0 0.0
    %447 = vmatpush1.xpose.msra.mxu0 0.0
    %448 = vmatprep.subr.mxu0 0.0
    %449 = vmatpush1.xpose.msra.mxu0 0.0
    %450 = vmatprep.subr.mxu0 0.0
    %451 = vmatpush1.xpose.msra.mxu0 0.0
    %452 = vmatprep.subr.mxu0 0.0
    %453 = vmatpush1.xpose.msra.mxu0 0.0
    %454 = vmatprep.subr.mxu0 0.0
    %455 = vmatpush1.xpose.msra.mxu0 0.0
    %456 = vmatprep.subr.mxu0 0.0
    %457 = vmatpush1.xpose.msra.mxu0 0.0
    %458 = vmatprep.subr.mxu0 0.0
    %459 = vmatpush1.xpose.msra.mxu0 0.0
    %460 = vmatprep.subr.mxu0 0.0
    %461 = vmatpush1.xpose.msra.mxu0 0.0
    %462 = vmatprep.subr.mxu0 0.0
    %463 = vmatpush1.xpose.msra.mxu0 0.0
    %464 = vmatprep.subr.mxu0 0.0
    %465 = vmatpush1.xpose.msra.mxu0 0.0
    %466 = vmatprep.subr.mxu0 0.0
    %467 = vmatpush1.xpose.msra.mxu0 0.0
    %468 = vmatprep.subr.mxu0 0.0
    %469 = vmatpush1.xpose.msra.mxu0 0.0
    %470 = vmatprep.subr.mxu0 0.0
    %471 = vmatpush1.xpose.msra.mxu0 0.0
    %472 = vmatprep.mubr.f32.mxu0 %v381
    %473 = vmatmul.mubr.f32.gmra.mrb[0].mxu0 %v373
    %v474 = vpop.f32.mrb[0].mxu0
    %v475 = vadd.f32 0.0, %v474
    %v476 = vpop.f32.mrb[0].mxu0
    %477 = vdwg.mxu0
    %478 = vmatprep.subr.mxu0 %v382
    %479 = vmatpush1.xpose.msra.mxu0 %v380
    %480 = vmatprep.subr.mxu0 0.0
    %481 = vmatpush1.xpose.msra.mxu0 0.0
    %482 = vmatprep.subr.mxu0 0.0
    %483 = vmatpush1.xpose.msra.mxu0 0.0
    %484 = vmatprep.subr.mxu0 0.0
    %485 = vmatpush1.xpose.msra.mxu0 0.0
    %486 = vmatprep.subr.mxu0 0.0
    %487 = vmatpush1.xpose.msra.mxu0 0.0
    %488 = vmatprep.subr.mxu0 0.0
    %489 = vmatpush1.xpose.msra.mxu0 0.0
    %490 = vmatprep.subr.mxu0 0.0
    %491 = vmatpush1.xpose.msra.mxu0 0.0
    %492 = vmatprep.subr.mxu0 0.0
    %493 = vmatpush1.xpose.msra.mxu0 0.0
    %494 = vmatprep.subr.mxu0 0.0
    %495 = vmatpush1.xpose.msra.mxu0 0.0
    %496 = vmatprep.subr.mxu0 0.0
    %497 = vmatpush1.xpose.msra.mxu0 0.0
    %498 = vmatprep.subr.mxu0 0.0
    %499 = vmatpush1.xpose.msra.mxu0 0.0
    %500 = vmatprep.subr.mxu0 0.0
    %501 = vmatpush1.xpose.msra.mxu0 0.0
    %502 = vmatprep.subr.mxu0 0.0
    %503 = vmatpush1.xpose.msra.mxu0 0.0
    %504 = vmatprep.subr.mxu0 0.0
    %505 = vmatpush1.xpose.msra.mxu0 0.0
    %506 = vmatprep.subr.mxu0 0.0
    %507 = vmatpush1.xpose.msra.mxu0 0.0
    %508 = vmatprep.subr.mxu0 0.0
    %509 = vmatpush1.xpose.msra.mxu0 0.0
    %510 = vmatprep.subr.mxu0 0.0
    %511 = vmatpush1.xpose.msra.mxu0 0.0
    %512 = vmatprep.subr.mxu0 0.0
    %513 = vmatpush1.xpose.msra.mxu0 0.0
    %514 = vmatprep.subr.mxu0 0.0
    %515 = vmatpush1.xpose.msra.mxu0 0.0
    %516 = vmatprep.subr.mxu0 0.0
    %517 = vmatpush1.xpose.msra.mxu0 0.0
    %518 = vmatprep.subr.mxu0 0.0
    %519 = vmatpush1.xpose.msra.mxu0 0.0
    %520 = vmatprep.subr.mxu0 0.0
    %521 = vmatpush1.xpose.msra.mxu0 0.0
    %522 = vmatprep.subr.mxu0 0.0
    %523 = vmatpush1.xpose.msra.mxu0 0.0
    %524 = vmatprep.subr.mxu0 0.0
    %525 = vmatpush1.xpose.msra.mxu0 0.0
    %526 = vmatprep.subr.mxu0 0.0
    %527 = vmatpush1.xpose.msra.mxu0 0.0
    %528 = vmatprep.subr.mxu0 0.0
    %529 = vmatpush1.xpose.msra.mxu0 0.0
    %530 = vmatprep.subr.mxu0 0.0
    %531 = vmatpush1.xpose.msra.mxu0 0.0
    %532 = vmatprep.subr.mxu0 0.0
    %533 = vmatpush1.xpose.msra.mxu0 0.0
    %534 = vmatprep.subr.mxu0 0.0
    %535 = vmatpush1.xpose.msra.mxu0 0.0
    %536 = vmatprep.subr.mxu0 0.0
    %537 = vmatpush1.xpose.msra.mxu0 0.0
    %538 = vmatprep.subr.mxu0 0.0
    %539 = vmatpush1.xpose.msra.mxu0 0.0
    %540 = vmatprep.subr.mxu0 0.0
    %541 = vmatpush1.xpose.msra.mxu0 0.0
    %542 = vmatprep.mubr.f32.mxu0 %v382
    %543 = vmatmul.mubr.f32.gmra.mrb[0].mxu0 %v380
    %v544 = vpop.f32.mrb[0].mxu0
    %v545 = vadd.f32 %v475, %v544
    %v546 = vpop.f32.mrb[0].mxu0
    %547 = vdwg.mxu0
    %548 = vmatprep.subr.mxu0 %v398
    %549 = vmatpush1.xpose.msra.mxu0 %v390
    %550 = vmatprep.subr.mxu0 0.0
    %551 = vmatpush1.xpose.msra.mxu0 0.0
    %552 = vmatprep.subr.mxu0 0.0
    %553 = vmatpush1.xpose.msra.mxu0 0.0
    %554 = vmatprep.subr.mxu0 0.0
    %555 = vmatpush1.xpose.msra.mxu0 0.0
    %556 = vmatprep.subr.mxu0 0.0
    %557 = vmatpush1.xpose.msra.mxu0 0.0
    %558 = vmatprep.subr.mxu0 0.0
    %559 = vmatpush1.xpose.msra.mxu0 0.0
    %560 = vmatprep.subr.mxu0 0.0
    %561 = vmatpush1.xpose.msra.mxu0 0.0
    %562 = vmatprep.subr.mxu0 0.0
    %563 = vmatpush1.xpose.msra.mxu0 0.0
    %564 = vmatprep.subr.mxu0 0.0
    %565 = vmatpush1.xpose.msra.mxu0 0.0
    %566 = vmatprep.subr.mxu0 0.0
    %567 = vmatpush1.xpose.msra.mxu0 0.0
    %568 = vmatprep.subr.mxu0 0.0
    %569 = vmatpush1.xpose.msra.mxu0 0.0
    %570 = vmatprep.subr.mxu0 0.0
    %571 = vmatpush1.xpose.msra.mxu0 0.0
    %572 = vmatprep.subr.mxu0 0.0
    %573 = vmatpush1.xpose.msra.mxu0 0.0
    %574 = vmatprep.subr.mxu0 0.0
    %575 = vmatpush1.xpose.msra.mxu0 0.0
    %576 = vmatprep.subr.mxu0 0.0
    %577 = vmatpush1.xpose.msra.mxu0 0.0
    %578 = vmatprep.subr.mxu0 0.0
    %579 = vmatpush1.xpose.msra.mxu0 0.0
    %580 = vmatprep.subr.mxu0 0.0
    %581 = vmatpush1.xpose.msra.mxu0 0.0
    %582 = vmatprep.subr.mxu0 0.0
    %583 = vmatpush1.xpose.msra.mxu0 0.0
    %584 = vmatprep.subr.mxu0 0.0
    %585 = vmatpush1.xpose.msra.mxu0 0.0
    %586 = vmatprep.subr.mxu0 0.0
    %587 = vmatpush1.xpose.msra.mxu0 0.0
    %588 = vmatprep.subr.mxu0 0.0
    %589 = vmatpush1.xpose.msra.mxu0 0.0
    %590 = vmatprep.subr.mxu0 0.0
    %591 = vmatpush1.xpose.msra.mxu0 0.0
    %592 = vmatprep.subr.mxu0 0.0
    %593 = vmatpush1.xpose.msra.mxu0 0.0
    %594 = vmatprep.subr.mxu0 0.0
    %595 = vmatpush1.xpose.msra.mxu0 0.0
    %596 = vmatprep.subr.mxu0 0.0
    %597 = vmatpush1.xpose.msra.mxu0 0.0
    %598 = vmatprep.subr.mxu0 0.0
    %599 = vmatpush1.xpose.msra.mxu0 0.0
    %600 = vmatprep.subr.mxu0 0.0
    %601 = vmatpush1.xpose.msra.mxu0 0.0
    %602 = vmatprep.subr.mxu0 0.0
    %603 = vmatpush1.xpose.msra.mxu0 0.0
    %604 = vmatprep.subr.mxu0 0.0
    %605 = vmatpush1.xpose.msra.mxu0 0.0
    %606 = vmatprep.subr.mxu0 0.0
    %607 = vmatpush1.xpose.msra.mxu0 0.0
    %608 = vmatprep.subr.mxu0 0.0
    %609 = vmatpush1.xpose.msra.mxu0 0.0
    %610 = vmatprep.subr.mxu0 0.0
    %611 = vmatpush1.xpose.msra.mxu0 0.0
    %612 = vmatprep.mubr.f32.mxu0 %v398
    %613 = vmatmul.mubr.f32.gmra.mrb[0].mxu0 %v390
    %v614 = vpop.f32.mrb[0].mxu0
    %v615 = vadd.f32 %v545, %v614
    %v616 = vpop.f32.mrb[0].mxu0
    %617 = vdwg.mxu0
    %618 = vmatprep.subr.mxu0 %v399
    %619 = vmatpush1.xpose.msra.mxu0 %v397
    %620 = vmatprep.subr.mxu0 0.0
    %621 = vmatpush1.xpose.msra.mxu0 0.0
    %622 = vmatprep.subr.mxu0 0.0
    %623 = vmatpush1.xpose.msra.mxu0 0.0
    %624 = vmatprep.subr.mxu0 0.0
    %625 = vmatpush1.xpose.msra.mxu0 0.0
    %626 = vmatprep.subr.mxu0 0.0
    %627 = vmatpush1.xpose.msra.mxu0 0.0
    %628 = vmatprep.subr.mxu0 0.0
    %629 = vmatpush1.xpose.msra.mxu0 0.0
    %630 = vmatprep.subr.mxu0 0.0
    %631 = vmatpush1.xpose.msra.mxu0 0.0
    %632 = vmatprep.subr.mxu0 0.0
    %633 = vmatpush1.xpose.msra.mxu0 0.0
    %634 = vmatprep.subr.mxu0 0.0
    %635 = vmatpush1.xpose.msra.mxu0 0.0
    %636 = vmatprep.subr.mxu0 0.0
    %637 = vmatpush1.xpose.msra.mxu0 0.0
    %638 = vmatprep.subr.mxu0 0.0
    %639 = vmatpush1.xpose.msra.mxu0 0.0
    %640 = vmatprep.subr.mxu0 0.0
    %641 = vmatpush1.xpose.msra.mxu0 0.0
    %642 = vmatprep.subr.mxu0 0.0
    %643 = vmatpush1.xpose.msra.mxu0 0.0
    %644 = vmatprep.subr.mxu0 0.0
    %645 = vmatpush1.xpose.msra.mxu0 0.0
    %646 = vmatprep.subr.mxu0 0.0
    %647 = vmatpush1.xpose.msra.mxu0 0.0
    %648 = vmatprep.subr.mxu0 0.0
    %649 = vmatpush1.xpose.msra.mxu0 0.0
    %650 = vmatprep.subr.mxu0 0.0
    %651 = vmatpush1.xpose.msra.mxu0 0.0
    %652 = vmatprep.subr.mxu0 0.0
    %653 = vmatpush1.xpose.msra.mxu0 0.0
    %654 = vmatprep.subr.mxu0 0.0
    %655 = vmatpush1.xpose.msra.mxu0 0.0
    %656 = vmatprep.subr.mxu0 0.0
    %657 = vmatpush1.xpose.msra.mxu0 0.0
    %658 = vmatprep.subr.mxu0 0.0
    %659 = vmatpush1.xpose.msra.mxu0 0.0
    %660 = vmatprep.subr.mxu0 0.0
    %661 = vmatpush1.xpose.msra.mxu0 0.0
    %662 = vmatprep.subr.mxu0 0.0
    %663 = vmatpush1.xpose.msra.mxu0 0.0
    %664 = vmatprep.subr.mxu0 0.0
    %665 = vmatpush1.xpose.msra.mxu0 0.0
    %666 = vmatprep.subr.mxu0 0.0
    %667 = vmatpush1.xpose.msra.mxu0 0.0
    %668 = vmatprep.subr.mxu0 0.0
    %669 = vmatpush1.xpose.msra.mxu0 0.0
    %670 = vmatprep.subr.mxu0 0.0
    %671 = vmatpush1.xpose.msra.mxu0 0.0
    %672 = vmatprep.subr.mxu0 0.0
    %673 = vmatpush1.xpose.msra.mxu0 0.0
    %674 = vmatprep.subr.mxu0 0.0
    %675 = vmatpush1.xpose.msra.mxu0 0.0
    %676 = vmatprep.subr.mxu0 0.0
    %677 = vmatpush1.xpose.msra.mxu0 0.0
    %678 = vmatprep.subr.mxu0 0.0
    %679 = vmatpush1.xpose.msra.mxu0 0.0
    %680 = vmatprep.subr.mxu0 0.0
    %681 = vmatpush1.xpose.msra.mxu0 0.0
    %682 = vmatprep.mubr.f32.mxu0 %v399
    %683 = vmatmul.mubr.f32.gmra.mrb[0].mxu0 %v397
    %v684 = vpop.f32.mrb[0].mxu0
    %v685 = vadd.f32 %v615, %v684
    %v686 = vpop.f32.mrb[0].mxu0
    %687 = vdwg.mxu0
    %688 = vmatprep.subr.mxu0 %v381
    %689 = vmatpush1.xpose.msra.mxu0 %v373
    %690 = vmatprep.subr.mxu0 0.0
    %691 = vmatpush1.xpose.msra.mxu0 0.0
    %692 = vmatprep.subr.mxu0 0.0
    %693 = vmatpush1.xpose.msra.mxu0 0.0
    %694 = vmatprep.subr.mxu0 0.0
    %695 = vmatpush1.xpose.msra.mxu0 0.0
    %696 = vmatprep.subr.mxu0 0.0
    %697 = vmatpush1.xpose.msra.mxu0 0.0
    %698 = vmatprep.subr.mxu0 0.0
    %699 = vmatpush1.xpose.msra.mxu0 0.0
    %700 = vmatprep.subr.mxu0 0.0
    %701 = vmatpush1.xpose.msra.mxu0 0.0
    %702 = vmatprep.subr.mxu0 0.0
    %703 = vmatpush1.xpose.msra.mxu0 0.0
    %704 = vmatprep.subr.mxu0 0.0
    %705 = vmatpush1.xpose.msra.mxu0 0.0
    %706 = vmatprep.subr.mxu0 0.0
    %707 = vmatpush1.xpose.msra.mxu0 0.0
    %708 = vmatprep.subr.mxu0 0.0
    %709 = vmatpush1.xpose.msra.mxu0 0.0
    %710 = vmatprep.subr.mxu0 0.0
    %711 = vmatpush1.xpose.msra.mxu0 0.0
    %712 = vmatprep.subr.mxu0 0.0
    %713 = vmatpush1.xpose.msra.mxu0 0.0
    %714 = vmatprep.subr.mxu0 0.0
    %715 = vmatpush1.xpose.msra.mxu0 0.0
    %716 = vmatprep.subr.mxu0 0.0
    %717 = vmatpush1.xpose.msra.mxu0 0.0
    %718 = vmatprep.subr.mxu0 0.0
    %719 = vmatpush1.xpose.msra.mxu0 0.0
    %720 = vmatprep.subr.mxu0 0.0
    %721 = vmatpush1.xpose.msra.mxu0 0.0
    %722 = vmatprep.subr.mxu0 0.0
    %723 = vmatpush1.xpose.msra.mxu0 0.0
    %724 = vmatprep.subr.mxu0 0.0
    %725 = vmatpush1.xpose.msra.mxu0 0.0
    %726 = vmatprep.subr.mxu0 0.0
    %727 = vmatpush1.xpose.msra.mxu0 0.0
    %728 = vmatprep.subr.mxu0 0.0
    %729 = vmatpush1.xpose.msra.mxu0 0.0
    %730 = vmatprep.subr.mxu0 0.0
    %731 = vmatpush1.xpose.msra.mxu0 0.0
    %732 = vmatprep.subr.mxu0 0.0
    %733 = vmatpush1.xpose.msra.mxu0 0.0
    %734 = vmatprep.subr.mxu0 0.0
    %735 = vmatpush1.xpose.msra.mxu0 0.0
    %736 = vmatprep.subr.mxu0 0.0
    %737 = vmatpush1.xpose.msra.mxu0 0.0
    %738 = vmatprep.subr.mxu0 0.0
    %739 = vmatpush1.xpose.msra.mxu0 0.0
    %740 = vmatprep.subr.mxu0 0.0
    %741 = vmatpush1.xpose.msra.mxu0 0.0
    %742 = vmatprep.subr.mxu0 0.0
    %743 = vmatpush1.xpose.msra.mxu0 0.0
    %744 = vmatprep.subr.mxu0 0.0
    %745 = vmatpush1.xpose.msra.mxu0 0.0
    %746 = vmatprep.subr.mxu0 0.0
    %747 = vmatpush1.xpose.msra.mxu0 0.0
    %748 = vmatprep.subr.mxu0 0.0
    %749 = vmatpush1.xpose.msra.mxu0 0.0
    %750 = vmatprep.subr.mxu0 0.0
    %751 = vmatpush1.xpose.msra.mxu0 0.0
    %752 = vmatprep.mubr.f32.mxu0 %v57
    %753 = vmatmul.mubr.f32.gmra.mrb[0].mxu0 %v49
    %v754 = vpop.f32.mrb[0].mxu0
    %v755 = vadd.f32 0.0, %v754
    %v756 = vpop.f32.mrb[0].mxu0
    %757 = vdwg.mxu0
    %758 = vmatprep.subr.mxu0 %v382
    %759 = vmatpush1.xpose.msra.mxu0 %v380
    %760 = vmatprep.subr.mxu0 0.0
    %761 = vmatpush1.xpose.msra.mxu0 0.0
    %762 = vmatprep.subr.mxu0 0.0
    %763 = vmatpush1.xpose.msra.mxu0 0.0
    %764 = vmatprep.subr.mxu0 0.0
    %765 = vmatpush1.xpose.msra.mxu0 0.0
    %766 = vmatprep.subr.mxu0 0.0
    %767 = vmatpush1.xpose.msra.mxu0 0.0
    %768 = vmatprep.subr.mxu0 0.0
    %769 = vmatpush1.xpose.msra.mxu0 0.0
    %770 = vmatprep.subr.mxu0 0.0
    %771 = vmatpush1.xpose.msra.mxu0 0.0
    %772 = vmatprep.subr.mxu0 0.0
    %773 = vmatpush1.xpose.msra.mxu0 0.0
    %774 = vmatprep.subr.mxu0 0.0
    %775 = vmatpush1.xpose.msra.mxu0 0.0
    %776 = vmatprep.subr.mxu0 0.0
    %777 = vmatpush1.xpose.msra.mxu0 0.0
    %778 = vmatprep.subr.mxu0 0.0
    %779 = vmatpush1.xpose.msra.mxu0 0.0
    %780 = vmatprep.subr.mxu0 0.0
    %781 = vmatpush1.xpose.msra.mxu0 0.0
    %782 = vmatprep.subr.mxu0 0.0
    %783 = vmatpush1.xpose.msra.mxu0 0.0
    %784 = vmatprep.subr.mxu0 0.0
    %785 = vmatpush1.xpose.msra.mxu0 0.0
    %786 = vmatprep.subr.mxu0 0.0
    %787 = vmatpush1.xpose.msra.mxu0 0.0
    %788 = vmatprep.subr.mxu0 0.0
    %789 = vmatpush1.xpose.msra.mxu0 0.0
    %790 = vmatprep.subr.mxu0 0.0
    %791 = vmatpush1.xpose.msra.mxu0 0.0
    %792 = vmatprep.subr.mxu0 0.0
    %793 = vmatpush1.xpose.msra.mxu0 0.0
    %794 = vmatprep.subr.mxu0 0.0
    %795 = vmatpush1.xpose.msra.mxu0 0.0
    %796 = vmatprep.subr.mxu0 0.0
    %797 = vmatpush1.xpose.msra.mxu0 0.0
    %798 = vmatprep.subr.mxu0 0.0
    %799 = vmatpush1.xpose.msra.mxu0 0.0
    %800 = vmatprep.subr.mxu0 0.0
    %801 = vmatpush1.xpose.msra.mxu0 0.0
    %802 = vmatprep.subr.mxu0 0.0
    %803 = vmatpush1.xpose.msra.mxu0 0.0
    %804 = vmatprep.subr.mxu0 0.0
    %805 = vmatpush1.xpose.msra.mxu0 0.0
    %806 = vmatprep.subr.mxu0 0.0
    %807 = vmatpush1.xpose.msra.mxu0 0.0
    %808 = vmatprep.subr.mxu0 0.0
    %809 = vmatpush1.xpose.msra.mxu0 0.0
    %810 = vmatprep.subr.mxu0 0.0
    %811 = vmatpush1.xpose.msra.mxu0 0.0
    %812 = vmatprep.subr.mxu0 0.0
    %813 = vmatpush1.xpose.msra.mxu0 0.0
    %814 = vmatprep.subr.mxu0 0.0
    %815 = vmatpush1.xpose.msra.mxu0 0.0
    %816 = vmatprep.subr.mxu0 0.0
    %817 = vmatpush1.xpose.msra.mxu0 0.0
    %818 = vmatprep.subr.mxu0 0.0
    %819 = vmatpush1.xpose.msra.mxu0 0.0
    %820 = vmatprep.subr.mxu0 0.0
    %821 = vmatpush1.xpose.msra.mxu0 0.0
    %822 = vmatprep.mubr.f32.mxu0 %v58
    %823 = vmatmul.mubr.f32.gmra.mrb[0].mxu0 %v56
    %v824 = vpop.f32.mrb[0].mxu0
    %v825 = vadd.f32 %v755, %v824
    %v826 = vpop.f32.mrb[0].mxu0
    %827 = vdwg.mxu0
    %828 = vmatprep.subr.mxu0 %v398
    %829 = vmatpush1.xpose.msra.mxu0 %v390
    %830 = vmatprep.subr.mxu0 0.0
    %831 = vmatpush1.xpose.msra.mxu0 0.0
    %832 = vmatprep.subr.mxu0 0.0
    %833 = vmatpush1.xpose.msra.mxu0 0.0
    %834 = vmatprep.subr.mxu0 0.0
    %835 = vmatpush1.xpose.msra.mxu0 0.0
    %836 = vmatprep.subr.mxu0 0.0
    %837 = vmatpush1.xpose.msra.mxu0 0.0
    %838 = vmatprep.subr.mxu0 0.0
    %839 = vmatpush1.xpose.msra.mxu0 0.0
    %840 = vmatprep.subr.mxu0 0.0
    %841 = vmatpush1.xpose.msra.mxu0 0.0
    %842 = vmatprep.subr.mxu0 0.0
    %843 = vmatpush1.xpose.msra.mxu0 0.0
    %844 = vmatprep.subr.mxu0 0.0
    %845 = vmatpush1.xpose.msra.mxu0 0.0
    %846 = vmatprep.subr.mxu0 0.0
    %847 = vmatpush1.xpose.msra.mxu0 0.0
    %848 = vmatprep.subr.mxu0 0.0
    %849 = vmatpush1.xpose.msra.mxu0 0.0
    %850 = vmatprep.subr.mxu0 0.0
    %851 = vmatpush1.xpose.msra.mxu0 0.0
    %852 = vmatprep.subr.mxu0 0.0
    %853 = vmatpush1.xpose.msra.mxu0 0.0
    %854 = vmatprep.subr.mxu0 0.0
    %855 = vmatpush1.xpose.msra.mxu0 0.0
    %856 = vmatprep.subr.mxu0 0.0
    %857 = vmatpush1.xpose.msra.mxu0 0.0
    %858 = vmatprep.subr.mxu0 0.0
    %859 = vmatpush1.xpose.msra.mxu0 0.0
    %860 = vmatprep.subr.mxu0 0.0
    %861 = vmatpush1.xpose.msra.mxu0 0.0
    %862 = vmatprep.subr.mxu0 0.0
    %863 = vmatpush1.xpose.msra.mxu0 0.0
    %864 = vmatprep.subr.mxu0 0.0
    %865 = vmatpush1.xpose.msra.mxu0 0.0
    %866 = vmatprep.subr.mxu0 0.0
    %867 = vmatpush1.xpose.msra.mxu0 0.0
    %868 = vmatprep.subr.mxu0 0.0
    %869 = vmatpush1.xpose.msra.mxu0 0.0
    %870 = vmatprep.subr.mxu0 0.0
    %871 = vmatpush1.xpose.msra.mxu0 0.0
    %872 = vmatprep.subr.mxu0 0.0
    %873 = vmatpush1.xpose.msra.mxu0 0.0
    %874 = vmatprep.subr.mxu0 0.0
    %875 = vmatpush1.xpose.msra.mxu0 0.0
    %876 = vmatprep.subr.mxu0 0.0
    %877 = vmatpush1.xpose.msra.mxu0 0.0
    %878 = vmatprep.subr.mxu0 0.0
    %879 = vmatpush1.xpose.msra.mxu0 0.0
    %880 = vmatprep.subr.mxu0 0.0
    %881 = vmatpush1.xpose.msra.mxu0 0.0
    %882 = vmatprep.subr.mxu0 0.0
    %883 = vmatpush1.xpose.msra.mxu0 0.0
    %884 = vmatprep.subr.mxu0 0.0
    %885 = vmatpush1.xpose.msra.mxu0 0.0
    %886 = vmatprep.subr.mxu0 0.0
    %887 = vmatpush1.xpose.msra.mxu0 0.0
    %888 = vmatprep.subr.mxu0 0.0
    %889 = vmatpush1.xpose.msra.mxu0 0.0
    %890 = vmatprep.subr.mxu0 0.0
    %891 = vmatpush1.xpose.msra.mxu0 0.0
    %892 = vmatprep.mubr.f32.mxu0 %v74
    %893 = vmatmul.mubr.f32.gmra.mrb[0].mxu0 %v66
    %v894 = vpop.f32.mrb[0].mxu0
    %v895 = vadd.f32 %v825, %v894
    %v896 = vpop.f32.mrb[0].mxu0
    %897 = vdwg.mxu0
    %898 = vmatprep.subr.mxu0 %v399
    %899 = vmatpush1.xpose.msra.mxu0 %v397
    %900 = vmatprep.subr.mxu0 0.0
    %901 = vmatpush1.xpose.msra.mxu0 0.0
    %902 = vmatprep.subr.mxu0 0.0
    %903 = vmatpush1.xpose.msra.mxu0 0.0
    %904 = vmatprep.subr.mxu0 0.0
    %905 = vmatpush1.xpose.msra.mxu0 0.0
    %906 = vmatprep.subr.mxu0 0.0
    %907 = vmatpush1.xpose.msra.mxu0 0.0
    %908 = vmatprep.subr.mxu0 0.0
    %909 = vmatpush1.xpose.msra.mxu0 0.0
    %910 = vmatprep.subr.mxu0 0.0
    %911 = vmatpush1.xpose.msra.mxu0 0.0
    %912 = vmatprep.subr.mxu0 0.0
    %913 = vmatpush1.xpose.msra.mxu0 0.0
    %914 = vmatprep.subr.mxu0 0.0
    %915 = vmatpush1.xpose.msra.mxu0 0.0
    %916 = vmatprep.subr.mxu0 0.0
    %917 = vmatpush1.xpose.msra.mxu0 0.0
    %918 = vmatprep.subr.mxu0 0.0
    %919 = vmatpush1.xpose.msra.mxu0 0.0
    %920 = vmatprep.subr.mxu0 0.0
    %921 = vmatpush1.xpose.msra.mxu0 0.0
    %922 = vmatprep.subr.mxu0 0.0
    %923 = vmatpush1.xpose.msra.mxu0 0.0
    %924 = vmatprep.subr.mxu0 0.0
    %925 = vmatpush1.xpose.msra.mxu0 0.0
    %926 = vmatprep.subr.mxu0 0.0
    %927 = vmatpush1.xpose.msra.mxu0 0.0
    %928 = vmatprep.subr.mxu0 0.0
    %929 = vmatpush1.xpose.msra.mxu0 0.0
    %930 = vmatprep.subr.mxu0 0.0
    %931 = vmatpush1.xpose.msra.mxu0 0.0
    %932 = vmatprep.subr.mxu0 0.0
    %933 = vmatpush1.xpose.msra.mxu0 0.0
    %934 = vmatprep.subr.mxu0 0.0
    %935 = vmatpush1.xpose.msra.mxu0 0.0
    %936 = vmatprep.subr.mxu0 0.0
    %937 = vmatpush1.xpose.msra.mxu0 0.0
    %938 = vmatprep.subr.mxu0 0.0
    %939 = vmatpush1.xpose.msra.mxu0 0.0
    %940 = vmatprep.subr.mxu0 0.0
    %941 = vmatpush1.xpose.msra.mxu0 0.0
    %942 = vmatprep.subr.mxu0 0.0
    %943 = vmatpush1.xpose.msra.mxu0 0.0
    %944 = vmatprep.subr.mxu0 0.0
    %945 = vmatpush1.xpose.msra.mxu0 0.0
    %946 = vmatprep.subr.mxu0 0.0
    %947 = vmatpush1.xpose.msra.mxu0 0.0
    %948 = vmatprep.subr.mxu0 0.0
    %949 = vmatpush1.xpose.msra.mxu0 0.0
    %950 = vmatprep.subr.mxu0 0.0
    %951 = vmatpush1.xpose.msra.mxu0 0.0
    %952 = vmatprep.subr.mxu0 0.0
    %953 = vmatpush1.xpose.msra.mxu0 0.0
    %954 = vmatprep.subr.mxu0 0.0
    %955 = vmatpush1.xpose.msra.mxu0 0.0
    %956 = vmatprep.subr.mxu0 0.0
    %957 = vmatpush1.xpose.msra.mxu0 0.0
    %958 = vmatprep.subr.mxu0 0.0
    %959 = vmatpush1.xpose.msra.mxu0 0.0
    %960 = vmatprep.subr.mxu0 0.0
    %961 = vmatpush1.xpose.msra.mxu0 0.0
    %962 = vmatprep.mubr.f32.mxu0 %v75
    %963 = vmatmul.mubr.f32.gmra.mrb[0].mxu0 %v73
    %v964 = vpop.f32.mrb[0].mxu0
    %v965 = vadd.f32 %v895, %v964
    %v966 = vpop.f32.mrb[0].mxu0
    %967 = vdwg.mxu0
    %p968 = scmp.eq.s32.totalorder 0, 0
    // Predicated region
    $region18: #{tpu_custom_call.1} parent=1 // pred_check
      %p969 = pneg %p968
    $region19: #{tpu_custom_call.1} parent=1 // pred_check_branch
      %971 = sbr.rel (%p969) target = $region21
    $region20: #{tpu_custom_call.1} parent=1 // pred_region
      %vm972 = vcmask 9216
      %973 = vst.msk [vmem:[#allocation2] sm:$0x3] %vm972, %v361
      %974 = vst.msk [vmem:[#allocation3] sm:$0x3] %vm972, %v685
      %975 = vst.msk [vmem:[#allocation4] sm:$0x3] %vm972, %v965
    $region21: #{tpu_custom_call.1} parent=1 // pred_fallthru
      _
    %p976 = scmp.ne.s32.totalorder 0, 0
    // Predicated region
    $region22: #{tpu_custom_call.1} parent=1 // pred_check
      %p977 = pneg %p976
    $region23: #{tpu_custom_call.1} parent=1 // pred_check_branch
      %979 = sbr.rel (%p977) target = $region25
    $region24: #{tpu_custom_call.1} parent=1 // pred_region
      %v980 = vld [vmem:[#allocation2] sm:$0x3]
      %v981 = vadd.f32 %v980, %v361
      %vm982 = vcmask 9216
      %983 = vst.msk [vmem:[#allocation2] sm:$0x3] %vm982, %v981
      %v984 = vld [vmem:[#allocation3] sm:$0x3]
      %v985 = vadd.f32 %v984, %v685
      %986 = vst.msk [vmem:[#allocation3] sm:$0x3] %vm982, %v985
      %v987 = vld [vmem:[#allocation4] sm:$0x3]
      %v988 = vadd.f32 %v987, %v965
      %989 = vst.msk [vmem:[#allocation4] sm:$0x3] %vm982, %v988
    $region25: #{tpu_custom_call.1} parent=1 // pred_fallthru
      _
    // Predicated region
    $region26: #{tpu_custom_call.1} parent=1 // pred_check
      %p990 = pneg %p968
    $region27: #{tpu_custom_call.1} parent=1 // pred_check_branch
      %992 = sbr.rel (%p990) target = $region29
    $region28: #{tpu_custom_call.1} parent=1 // pred_region
      %v993 = vld [vmem:[#allocation2] sm:$0x3]
      %v994 = vld [vmem:[#allocation3] sm:$0x3]
      %v995 = vld [vmem:[#allocation4] sm:$0x3]
      %v996 = vlaneseq
      %v997 = vshrl.u32 %v996, 7
      %v998 = vlaneseq
      %v999 = vand.u32 %v998, 127
      %vm1000 = vcmp.eq.s32.totalorder %v997, %v999
      %v1001 = vsel %vm1000, 1, 0
      %v1002 = vcvt.s32.f32 %v1001
      %v1003 = vmul.f32 %v993, %v1002
      %v1004 = vmul.f32 %v994, %v1002
      %vm1005 = vcmask 9216
      %v1006 = vsel %vm1005, %v1003, 0.0
      %1007 = vadd.xlane.f32.xlu0 %v1006
      %v1008 = vpop.xlane.xlu0 %1007
      %v1009 = vrot.slane %v1006, 4
      %v1010 = vadd.f32 %v1006, %v1009
      %v1011 = vrot.slane %v1010, 2
      %v1012 = vadd.f32 %v1010, %v1011
      %v1013 = vrot.slane %v1012, 1
      %v1014 = vadd.f32 %v1012, %v1013
      %v1015 = vsel %vm1005, %v1004, 0.0
      %1016 = vadd.xlane.f32.xlu0 %v1015
      %v1017 = vpop.xlane.xlu0 %1016
      %v1018 = vrot.slane %v1015, 4
      %v1019 = vadd.f32 %v1015, %v1018
      %v1020 = vrot.slane %v1019, 2
      %v1021 = vadd.f32 %v1019, %v1020
      %v1022 = vrot.slane %v1021, 1
      %v1023 = vadd.f32 %v1021, %v1022
      %v1024 = vadd.f32 %v1008, %v1014
      %v1025 = vmul.f32 %v993, 2.0
      %v1026 = vsub.f32 %v1024, %v1025
      %v1027 = vmul.f32 %v1026, -0.15923567
      %v1028 = vmul.f32 %v1027, 1.442695
      %v1029 = vpow.pop %v1028
      %v1030 = vadd.f32 %v1017, %v1023
      %v1031 = vmul.f32 %v994, 2.0
      %v1032 = vsub.f32 %v1030, %v1031
      %v1033 = vmul.f32 %v1032, -0.15923567
      %v1034 = vmul.f32 %v1033, 1.442695
      %v1035 = vpow.pop %v1034
      %v1036 = vadd.f32 %v1008, %v1023
      %v1037 = vmul.f32 %v995, 2.0
      %v1038 = vsub.f32 %v1036, %v1037
      %v1039 = vmul.f32 %v1038, -0.15923567
      %v1040 = vmul.f32 %v1039, 1.442695
      %v1041 = vpow.pop %v1040
      %v1042 = vsel %vm1005, %v1029, 0.0
      %1043 = vadd.xlane.f32.xlu0 %v1042
      %v1044 = vpop.xlane.xlu0 %1043
      %v1045 = vrot.slane %v1044, 4
      %v1046 = vadd.f32 %v1044, %v1045
      %v1047 = vrot.slane %v1046, 2
      %v1048 = vadd.f32 %v1046, %v1047
      %v1049 = vrot.slane %v1048, 1
      %v1050 = vadd.f32 %v1048, %v1049
      %s1051 = vtos %v1050
      %v1052 = vsel %vm1005, %v1035, 0.0
      %1053 = vadd.xlane.f32.xlu0 %v1052
      %v1054 = vpop.xlane.xlu0 %1053
      %v1055 = vrot.slane %v1054, 4
      %v1056 = vadd.f32 %v1054, %v1055
      %v1057 = vrot.slane %v1056, 2
      %v1058 = vadd.f32 %v1056, %v1057
      %v1059 = vrot.slane %v1058, 1
      %v1060 = vadd.f32 %v1058, %v1059
      %s1061 = vtos %v1060
      %s1062 = sadd.f32 %s1051, %s1061
      %s1063 = smul.f32 %s1062, 0.5
      %v1064 = vsel %vm1005, %v1041, 0.0
      %1065 = vadd.xlane.f32.xlu0 %v1064
      %v1066 = vpop.xlane.xlu0 %1065
      %v1067 = vrot.slane %v1066, 4
      %v1068 = vadd.f32 %v1066, %v1067
      %v1069 = vrot.slane %v1068, 2
      %v1070 = vadd.f32 %v1068, %v1069
      %v1071 = vrot.slane %v1070, 1
      %v1072 = vadd.f32 %v1070, %v1071
      %s1073 = vtos %v1072
      %s1074 = smul.f32 %s1073, 0.5
      %s1075 = ssub.f32 %s1063, %s1074
      %s1076 = scalar_lea.smem [#allocation10], 0
      %1077 = sst [smem:[%s1076]] %s1075
    $region29: #{tpu_custom_call.1} parent=1 // pred_fallthru
      _
    // Predicated region
    $region30: #{tpu_custom_call.1} parent=1 // pred_check
      _
    $region31: #{tpu_custom_call.1} parent=1 // pred_check_branch
      %1079 = sbr.rel (0) target = $region33
    $region32: #{tpu_custom_call.1} parent=1 // pred_region
      %s1081 = ssub.s32 16, 16
      %1082 = vsyncadd [#allocation7], %s1081
      %1085 = dma.smem_to_hbm [#allocation10], 16, %s2, [#allocation7]
    $region33: #{tpu_custom_call.1} parent=1 // pred_fallthru
      _
    // Predicated region
    $region34: #{tpu_custom_call.1} parent=1 // pred_check
      _
    $region35: #{tpu_custom_call.1} parent=1 // pred_check_branch
      %1087 = sbr.rel (0) target = $region37
    $region36: #{tpu_custom_call.1} parent=1 // pred_region
      %1088 = dma.done [#allocation7], 16
    $region37: #{tpu_custom_call.1} parent=1 // pred_fallthru
      _
    %1089 = sfence
    %1090 = vsyncpa [#allocation6], 1
    %1091 = vsyncpa [#allocation9], 1
    %1092 = vsyncpa [#allocation7], 1

</llo_original>
